<compile_context>
chip_gen: v5e
topology: v5e:2x2
jax: 0.10.0
libtpu: 0.0.40
codegen_flags: <defaults>
</compile_context>

<pallas_src>
import jax
import jax.numpy as jnp
from jax import lax
from jax.experimental import pallas as pl
from jax.experimental.pallas import tpu as pltpu


# Inner lane-chunk processed per fori_loop iteration.  256 lanes keeps the f32
# intermediates (h1: [64,256] = 16 vregs, h2: [32,256] = 8 vregs) comfortably
# inside the 64-vreg register file -> no spills, while the big outer batch
# tile amortizes the fixed per-grid-step cost.
_CHUNK = 256


def mlp_kernel(x_ref, w1_ref, b1_ref, w2_ref, b2_ref, w3_ref, b3_ref, o_ref):
    """Fused Linear(4,64)+ReLU -> Linear(64,32)+ReLU -> Linear(32,1).

    Transposed, lane-dense layout (batch on lanes):
      x_ref : [4,  TB]  compute dtype (bf16 by default)
      w1_ref: [64, 4 ]  (= W1^T)       b1_ref: [64, 1] f32
      w2_ref: [32, 64]  (= W2^T)       b2_ref: [32, 1] f32
      w3_ref: [1,  32]  (= W3^T, f32)  b3_ref: [1]     f32 scalar in SMEM
      o_ref : [1,  TB]  f32
    """
    # Hoist resident weights / biases (and their lane-broadcasts) out of the
    # chunk loop.
    w1 = w1_ref[...]                                        # [64, 4]
    w2 = w2_ref[...]                                        # [32, 64]
    w3 = w3_ref[...]                                        # [1, 32] f32
    b1 = jnp.broadcast_to(b1_ref[...], (64, _CHUNK))        # f32
    b2 = jnp.broadcast_to(b2_ref[...], (32, _CHUNK))        # f32
    b3 = b3_ref[0]                                          # f32 scalar

    num_chunks = x_ref.shape[1] // _CHUNK

    def body(c, carry):
        off = pl.multiple_of(c * _CHUNK, _CHUNK)
        x = x_ref[:, pl.ds(off, _CHUNK)]                    # [4, CH]
        # layer 1 + ReLU: [64,4] @ [4,CH] -> [64,CH], f32 MXU accumulate.
        h1 = jnp.dot(w1, x, preferred_element_type=jnp.float32)
        h1 = jnp.maximum(h1 + b1, 0.0)
        # layer 2 + ReLU: [32,64] @ [64,CH] -> [32,CH].
        h2 = jnp.dot(w2, h1.astype(w2.dtype),
                     preferred_element_type=jnp.float32)
        h2 = jnp.maximum(h2 + b2, 0.0)
        # layer 3 on the MXU (review: keep the VPU free): [1,32]@[32,CH].
        out = jnp.dot(w3, h2, preferred_element_type=jnp.float32) + b3
        o_ref[:, pl.ds(off, _CHUNK)] = out.astype(o_ref.dtype)
        return carry

    lax.fori_loop(0, num_chunks, body, 0)


def _dotacion_impl(x, params, *, batch_tile=32768,
                   compute_dtype=jnp.bfloat16):
    """Forward pass of DotacionPersonalNN as one fused Pallas TPU kernel.

    x: [B, 4].  params: (w1, b1, w2, b2, w3, b3) with w_i stored [in, out]
    and b_i stored [out]  (x @ w_i + b_i == PyTorch's x @ W_i.T + b_i).
    """
    w1, b1, w2, b2, w3, b3 = params
    B = x.shape[0]

    # ---- batch tiling -------------------------------------------------------
    # Work in units of the 256-lane inner chunk.  Pick a large tile (default
    # 32K lanes) to amortize the per-grid-step overhead, but balance it so the
    # grid has >= 2 steps whenever the batch allows it (v7x megacore), and
    # never pad much beyond the batch.
    n_chunks = pl.cdiv(B, _CHUNK)
    B_ch = n_chunks * _CHUNK
    tb_req = max(_CHUNK, (min(batch_tile, B_ch) // _CHUNK) * _CHUNK)
    min_steps = 2 if n_chunks >= 2 else 1
    n_steps = max(min_steps, pl.cdiv(B_ch, tb_req))
    TB = pl.cdiv(n_chunks, n_steps) * _CHUNK        # multiple of _CHUNK (>=128)
    B_pad = n_steps * TB
    grid = (n_steps,)

    # ---- lane-dense transposed input (pad + transpose + cast fuse under jit)
    xT = jnp.zeros((4, B_pad), compute_dtype).at[:, :B].set(
        x.astype(compute_dtype).T)

    # Pre-transposed weights so the kernel computes W^T @ x.  Matmul operands
    # may be bf16; biases and the final layer stay f32.
    w1t = w1.T.astype(compute_dtype)                 # [64, 4]
    w2t = w2.T.astype(compute_dtype)                 # [32, 64]
    w3t = w3.T.astype(jnp.float32)                   # [1, 32]
    b1c = b1.reshape(64, 1).astype(jnp.float32)
    b2c = b2.reshape(32, 1).astype(jnp.float32)
    b3s = b3.reshape(1).astype(jnp.float32)          # scalar -> SMEM

    resident = lambda i: (0, 0)      # same block every step -> DMA'd once

    itemsize = jnp.dtype(compute_dtype).itemsize
    flops = 2 * B_pad * (4 * 64 + 64 * 32 + 32)
    bytes_accessed = (4 * B_pad * itemsize            # x
                      + 1 * B_pad * 4                 # out (f32)
                      + (64 * 4 + 32 * 64) * itemsize # W1, W2
                      + (64 + 32 + 32 + 1) * 4)       # biases + W3 + b3

    out = pl.pallas_call(
        mlp_kernel,
        out_shape=jax.ShapeDtypeStruct((1, B_pad), jnp.float32),
        grid=grid,
        in_specs=[
            pl.BlockSpec((4, TB), lambda i: (0, i)),                 # x tile
            pl.BlockSpec((64, 4), resident),                         # W1^T
            pl.BlockSpec((64, 1), resident),                         # b1
            pl.BlockSpec((32, 64), resident),                        # W2^T
            pl.BlockSpec((32, 1), resident),                         # b2
            pl.BlockSpec((1, 32), resident),                         # W3^T
            pl.BlockSpec(memory_space=pltpu.MemorySpace.SMEM),       # b3
        ],
        out_specs=pl.BlockSpec((1, TB), lambda i: (0, i)),
        compiler_params=pltpu.CompilerParams(
            dimension_semantics=("parallel",)),
        cost_estimate=pl.CostEstimate(
            flops=flops, transcendentals=0, bytes_accessed=bytes_accessed),
    )(xT, w1t, b1c, w2t, b2c, w3t, b3s)

    # Back to the PyTorch layout [B, 1], dropping the pad lanes.
    return out[0, :B].reshape(B, 1)


# jit the wrapper so the x pad/transpose/cast and the tiny weight-prep ops
# fuse instead of dispatching as separate XLA passes per call.
dotacion_personal_nn = jax.jit(
    _dotacion_impl, static_argnames=("batch_tile", "compute_dtype"))


def init_params(key):
    """Deterministic PyTorch-style Linear init: U(-1/sqrt(fan_in), 1/sqrt(fan_in))."""
    def linear(key, fan_in, fan_out):
        kw, kb = jax.random.split(key)
        bound = 1.0 / jnp.sqrt(fan_in)
        w = jax.random.uniform(kw, (fan_in, fan_out), jnp.float32, -bound, bound)
        b = jax.random.uniform(kb, (fan_out,), jnp.float32, -bound, bound)
        return w, b

    k1, k2, k3 = jax.random.split(key, 3)
    w1, b1 = linear(k1, 4, 64)
    w2, b2 = linear(k2, 64, 32)
    w3, b3 = linear(k3, 32, 1)
    return w1, b1, w2, b2, w3, b3


def reference(x, params):
    w1, b1, w2, b2, w3, b3 = params
    h = jnp.maximum(x @ w1 + b1, 0.0)
    h = jnp.maximum(h @ w2 + b2, 0.0)
    return h @ w3 + b3


if __name__ == "__main__":
    key = jax.random.PRNGKey(0)
    kx, kp = jax.random.split(key)
    params = init_params(kp)

    # Small shape consistent with the module: batch=8, in_features=4.
    # f32 operands -> tight tolerance (MXU default precision only).
    x = jax.random.normal(kx, (8, 4), jnp.float32)
    out = dotacion_personal_nn(x, params, compute_dtype=jnp.float32)
    jax.block_until_ready(out)
    ref = reference(x, params)
    assert out.shape == (8, 1), out.shape
    assert jnp.allclose(out, ref, atol=2e-3, rtol=2e-3), (out, ref)

    # Multi-tile grid (>= 2 steps for megacore) + ragged tail + default bf16
    # matmul operands (looser tolerance accounts for the bf16 cast of x/W).
    x_big = jax.random.normal(kx, (1000, 4), jnp.float32)
    out_big = dotacion_personal_nn(x_big, params)
    jax.block_until_ready(out_big)
    ref_big = reference(x_big, params)
    assert out_big.shape == (1000, 1), out_big.shape
    assert jnp.allclose(out_big, ref_big, atol=3e-2, rtol=3e-2)

    print("KERNEL_OK")
</pallas_src>

<mosaic_0001>
module attributes {stable_mosaic.version = 11 : i64} {
  func.func @mlp_kernel(%arg0: i32, %arg1: memref<4x256xf32, #tpu.memory_space<vmem>>, %arg2: memref<64x4xf32, #tpu.memory_space<vmem>>, %arg3: memref<64x1xf32, #tpu.memory_space<vmem>>, %arg4: memref<32x64xf32, #tpu.memory_space<vmem>>, %arg5: memref<32x1xf32, #tpu.memory_space<vmem>>, %arg6: memref<1x32xf32, #tpu.memory_space<vmem>>, %arg7: memref<1xf32, #tpu.memory_space<smem>>, %arg8: memref<1x256xf32, #tpu.memory_space<vmem>>) attributes {dimension_semantics = [#tpu.dimension_semantics<parallel>], iteration_bounds = array<i64: 1>, scalar_prefetch = 0 : i64, scratch_operands = 0 : i64, tpu.core_type = #tpu.core_type<tc>, window_params = [{transform_indices = @transform_0, window_bounds = array<i64: 4, 256>}, {pipeline_mode = #tpu.pipeline_mode<synchronous>, transform_indices = @transform_1, window_bounds = array<i64: 64, 4>}, {pipeline_mode = #tpu.pipeline_mode<synchronous>, transform_indices = @transform_2, window_bounds = array<i64: 64, 1>}, {pipeline_mode = #tpu.pipeline_mode<synchronous>, transform_indices = @transform_3, window_bounds = array<i64: 32, 64>}, {pipeline_mode = #tpu.pipeline_mode<synchronous>, transform_indices = @transform_4, window_bounds = array<i64: 32, 1>}, {pipeline_mode = #tpu.pipeline_mode<synchronous>, transform_indices = @transform_5, window_bounds = array<i64: 1, 32>}, {transform_indices = @transform_6, window_bounds = array<i64: 1>}, {transform_indices = @transform_7, window_bounds = array<i64: 1, 256>}]} {
    %c0 = arith.constant 0 : index
    %c0_0 = arith.constant 0 : index
    %0 = vector.load %arg2[%c0, %c0_0] : memref<64x4xf32, #tpu.memory_space<vmem>>, vector<64x4xf32>
    %c0_1 = arith.constant 0 : index
    %c0_2 = arith.constant 0 : index
    %1 = vector.load %arg4[%c0_1, %c0_2] : memref<32x64xf32, #tpu.memory_space<vmem>>, vector<32x64xf32>
    %c0_3 = arith.constant 0 : index
    %c0_4 = arith.constant 0 : index
    %2 = vector.load %arg6[%c0_3, %c0_4] : memref<1x32xf32, #tpu.memory_space<vmem>>, vector<1x32xf32>
    %c0_5 = arith.constant 0 : index
    %c0_6 = arith.constant 0 : index
    %3 = vector.load %arg3[%c0_5, %c0_6] : memref<64x1xf32, #tpu.memory_space<vmem>>, vector<64x1xf32>
    %4 = vector.shape_cast %3 : vector<64x1xf32> to vector<64x1xf32>
    %5 = vector.broadcast %4 : vector<64x1xf32> to vector<64x256xf32>
    %c0_7 = arith.constant 0 : index
    %c0_8 = arith.constant 0 : index
    %6 = vector.load %arg5[%c0_7, %c0_8] : memref<32x1xf32, #tpu.memory_space<vmem>>, vector<32x1xf32>
    %7 = vector.shape_cast %6 : vector<32x1xf32> to vector<32x1xf32>
    %8 = vector.broadcast %7 : vector<32x1xf32> to vector<32x256xf32>
    %c0_9 = arith.constant 0 : index
    %9 = memref.load %arg7[%c0_9] : memref<1xf32, #tpu.memory_space<smem>>
    %c0_i32 = arith.constant 0 : i32
    %c256_i32 = arith.constant 256 : i32
    %10 = arith.muli %c0_i32, %c256_i32 : i32
    %11 = tpu.assume_multiple %10, 256 : i32
    %c0_10 = arith.constant 0 : index
    %12 = arith.index_cast %11 : i32 to index
    %13 = vector.load %arg1[%c0_10, %12] : memref<4x256xf32, #tpu.memory_space<vmem>>, vector<4x256xf32>
    %cst = arith.constant dense<0.000000e+00> : vector<64x256xf32>
    %14 = tpu.matmul %0, %13, %cst {dimension_numbers = #tpu.dot_dimension_numbers<[1], [0], [0], [1], [0, 0, 1, 1], [], []>} : vector<64x4xf32>, vector<4x256xf32>, vector<64x256xf32> -> vector<64x256xf32>
    %15 = arith.addf %14, %5 : vector<64x256xf32>
    %cst_11 = arith.constant 0.000000e+00 : f32
    %16 = vector.broadcast %cst_11 : f32 to vector<64x256xf32>
    %17 = arith.maximumf %15, %16 : vector<64x256xf32>
    %cst_12 = arith.constant dense<0.000000e+00> : vector<32x256xf32>
    %18 = tpu.matmul %1, %17, %cst_12 {dimension_numbers = #tpu.dot_dimension_numbers<[1], [0], [0], [1], [0, 0, 1, 1], [], []>} : vector<32x64xf32>, vector<64x256xf32>, vector<32x256xf32> -> vector<32x256xf32>
    %19 = arith.addf %18, %8 : vector<32x256xf32>
    %cst_13 = arith.constant 0.000000e+00 : f32
    %20 = vector.broadcast %cst_13 : f32 to vector<32x256xf32>
    %21 = arith.maximumf %19, %20 : vector<32x256xf32>
    %cst_14 = arith.constant dense<0.000000e+00> : vector<1x256xf32>
    %22 = tpu.matmul %2, %21, %cst_14 {dimension_numbers = #tpu.dot_dimension_numbers<[1], [0], [0], [1], [0, 0, 1, 1], [], []>} : vector<1x32xf32>, vector<32x256xf32>, vector<1x256xf32> -> vector<1x256xf32>
    %23 = vector.broadcast %9 : f32 to vector<1x256xf32>
    %24 = arith.addf %22, %23 : vector<1x256xf32>
    %c0_15 = arith.constant 0 : index
    %25 = arith.index_cast %11 : i32 to index
    %26 = vector.load %arg8[%c0_15, %25] : memref<1x256xf32, #tpu.memory_space<vmem>>, vector<1x256xf32>
    tpu.vector_store %arg8[%c0_15, %25], %24 {strides = array<i32>} : memref<1x256xf32, #tpu.memory_space<vmem>>, vector<1x256xf32>,
    %c1_i32 = arith.constant 1 : i32
    return
  }
  func.func @transform_0(%arg0: i32) -> (i32, i32) {
    %c0_i32 = arith.constant 0 : i32
    %c0_i32_0 = arith.constant 0 : i32
    return %c0_i32, %arg0 : i32, i32
  }
  func.func @transform_1(%arg0: i32) -> (i32, i32) {
    %c0_i32 = arith.constant 0 : i32
    %c0_i32_0 = arith.constant 0 : i32
    %c0_i32_1 = arith.constant 0 : i32
    return %c0_i32, %c0_i32_0 : i32, i32
  }
  func.func @transform_2(%arg0: i32) -> (i32, i32) {
    %c0_i32 = arith.constant 0 : i32
    %c0_i32_0 = arith.constant 0 : i32
    %c0_i32_1 = arith.constant 0 : i32
    return %c0_i32, %c0_i32_0 : i32, i32
  }
  func.func @transform_3(%arg0: i32) -> (i32, i32) {
    %c0_i32 = arith.constant 0 : i32
    %c0_i32_0 = arith.constant 0 : i32
    %c0_i32_1 = arith.constant 0 : i32
    return %c0_i32, %c0_i32_0 : i32, i32
  }
  func.func @transform_4(%arg0: i32) -> (i32, i32) {
    %c0_i32 = arith.constant 0 : i32
    %c0_i32_0 = arith.constant 0 : i32
    %c0_i32_1 = arith.constant 0 : i32
    return %c0_i32, %c0_i32_0 : i32, i32
  }
  func.func @transform_5(%arg0: i32) -> (i32, i32) {
    %c0_i32 = arith.constant 0 : i32
    %c0_i32_0 = arith.constant 0 : i32
    %c0_i32_1 = arith.constant 0 : i32
    return %c0_i32, %c0_i32_0 : i32, i32
  }
  func.func @transform_6(%arg0: i32) -> i32 {
    %c0_i32 = arith.constant 0 : i32
    %c0_i32_0 = arith.constant 0 : i32
    return %c0_i32 : i32
  }
  func.func @transform_7(%arg0: i32) -> (i32, i32) {
    %c0_i32 = arith.constant 0 : i32
    %c0_i32_0 = arith.constant 0 : i32
    return %c0_i32, %arg0 : i32, i32
  }
}

</mosaic_0001>

<llo_original>
// kernel: _dotacion_impl.1
$region0: #{_dotacion_impl.1}
  #allocation0 [shape = 'u32[]', space=smem, size = 0x4, offset = 0x4, fixed_abs, tag = 'smem constant byte address 0x4 - core index']
  #allocation1 [shape = 'u32[72,128]{1,0:T(1,128)}', space=vmem, size = 0x9000, scoped, tag = 'internal scratch']
  #allocation2 [shape = 'f32[1]{0:T(128)S(6)}', space=smem, size = 0x200, scoped, tag = 'scoped memory for _dotacion_impl.1']
  %s0 = inlined_call_operand.vmem [shape: f32[4,256], index: 0, kind: input, shape index: {}]
  %s1 = inlined_call_operand.vmem [shape: f32[64,4], index: 1, kind: input, shape index: {}]
  %s2 = inlined_call_operand.vmem [shape: f32[64,1], index: 2, kind: input, shape index: {}]
  %s3 = inlined_call_operand.vmem [shape: f32[32,64], index: 3, kind: input, shape index: {}]
  %s4 = inlined_call_operand.vmem [shape: f32[32,1], index: 4, kind: input, shape index: {}]
  %s5 = inlined_call_operand.vmem [shape: f32[1,32], index: 5, kind: input, shape index: {}]
  %s6 = inlined_call_operand.<no memory space> [shape: f32[1], index: 6, kind: input, shape index: {}]
  %s7 = inlined_call_operand.vmem [shape: f32[1,256], index: 7, kind: output, shape index: {}]
  %s8 = sld [smem:[#allocation0]]
  $region38: #{_dotacion_impl.1} parent=0
    _
  %s10 = ssub.s32 1, %s8
  %s11 = scalar_select 0, %s10, %s8
  %12 = sst [smem:[#allocation2]] %s6
  // Predicated region
  $region2: #{_dotacion_impl.1} parent=0 // pred_check
    _
  $region3: #{_dotacion_impl.1} parent=0 // pred_check_branch
    %14 = sbr.rel (0) target = $region5
  $region4: #{_dotacion_impl.1} parent=0 // pred_region
    _
  $region5: #{_dotacion_impl.1} parent=0 // pred_fallthru
    _
  // Predicated region
  $region6: #{_dotacion_impl.1} parent=0 // pred_check
    _
  $region7: #{_dotacion_impl.1} parent=0 // pred_check_branch
    %16 = sbr.rel (0) target = $region9
  $region8: #{_dotacion_impl.1} parent=0 // pred_region
    _
  $region9: #{_dotacion_impl.1} parent=0 // pred_fallthru
    _
  // Predicated region
  $region10: #{_dotacion_impl.1} parent=0 // pred_check
    _
  $region11: #{_dotacion_impl.1} parent=0 // pred_check_branch
    %18 = sbr.rel (0) target = $region13
  $region12: #{_dotacion_impl.1} parent=0 // pred_region
    _
  $region13: #{_dotacion_impl.1} parent=0 // pred_fallthru
    _
  // Predicated region
  $region14: #{_dotacion_impl.1} parent=0 // pred_check
    _
  $region15: #{_dotacion_impl.1} parent=0 // pred_check_branch
    %20 = sbr.rel (0) target = $region17
  $region16: #{_dotacion_impl.1} parent=0 // pred_region
    _
  $region17: #{_dotacion_impl.1} parent=0 // pred_fallthru
    _
  // Predicated region
  $region18: #{_dotacion_impl.1} parent=0 // pred_check
    _
  $region19: #{_dotacion_impl.1} parent=0 // pred_check_branch
    %22 = sbr.rel (0) target = $region21
  $region20: #{_dotacion_impl.1} parent=0 // pred_region
    _
  $region21: #{_dotacion_impl.1} parent=0 // pred_fallthru
    _
  // Predicated region
  $region22: #{_dotacion_impl.1} parent=0 // pred_check
    _
  $region23: #{_dotacion_impl.1} parent=0 // pred_check_branch
    %24 = sbr.rel (0) target = $region25
  $region24: #{_dotacion_impl.1} parent=0 // pred_region
    _
  $region25: #{_dotacion_impl.1} parent=0 // pred_fallthru
    _
  // Predicated region
  $region26: #{_dotacion_impl.1} parent=0 // pred_check
    _
  $region27: #{_dotacion_impl.1} parent=0 // pred_check_branch
    %26 = sbr.rel (0) target = $region29
  $region28: #{_dotacion_impl.1} parent=0 // pred_region
    _
  $region29: #{_dotacion_impl.1} parent=0 // pred_fallthru
    _
  %v27 = vld [vmem:[%s1] sm:$0xff]
  %v28 = vld [vmem:[%s1 + $0x8] sm:$0xff]
  %v29 = vld [vmem:[%s1 + $0x10] sm:$0xff]
  %v30 = vld [vmem:[%s1 + $0x18] sm:$0xff]
  %v31 = vld [vmem:[%s1 + $0x20] sm:$0xff]
  %v32 = vld [vmem:[%s1 + $0x28] sm:$0xff]
  %v33 = vld [vmem:[%s1 + $0x30] sm:$0xff]
  %v34 = vld [vmem:[%s1 + $0x38] sm:$0xff]
  %v35 = vld [vmem:[%s3] sm:$0xff]
  %v36 = vld [vmem:[%s3 + $0x8] sm:$0xff]
  %v37 = vld [vmem:[%s3 + $0x10] sm:$0xff]
  %v38 = vld [vmem:[%s3 + $0x18] sm:$0xff]
  %v39 = vld [vmem:[%s5] sm:$0x1]
  %v40 = vld [vmem:[%s2] sm:$0xff]
  %v41 = vld [vmem:[%s2 + $0x8] sm:$0xff]
  %v42 = vld [vmem:[%s2 + $0x10] sm:$0xff]
  %v43 = vld [vmem:[%s2 + $0x18] sm:$0xff]
  %v44 = vld [vmem:[%s2 + $0x20] sm:$0xff]
  %v45 = vld [vmem:[%s2 + $0x28] sm:$0xff]
  %v46 = vld [vmem:[%s2 + $0x30] sm:$0xff]
  %v47 = vld [vmem:[%s2 + $0x38] sm:$0xff]
  %49 = vset.pattern.permute.xlu0 0
  %50 = vperm.xlu0 %49, %v40
  %v51 = vpop.permute.xlu0 %50
  %54 = vset.pattern.permute.xlu0 0
  %55 = vperm.xlu0 %54, %v41
  %v56 = vpop.permute.xlu0 %55
  %59 = vset.pattern.permute.xlu0 0
  %60 = vperm.xlu0 %59, %v42
  %v61 = vpop.permute.xlu0 %60
  %64 = vset.pattern.permute.xlu0 0
  %65 = vperm.xlu0 %64, %v43
  %v66 = vpop.permute.xlu0 %65
  %69 = vset.pattern.permute.xlu0 0
  %70 = vperm.xlu0 %69, %v44
  %v71 = vpop.permute.xlu0 %70
  %74 = vset.pattern.permute.xlu0 0
  %75 = vperm.xlu0 %74, %v45
  %v76 = vpop.permute.xlu0 %75
  %79 = vset.pattern.permute.xlu0 0
  %80 = vperm.xlu0 %79, %v46
  %v81 = vpop.permute.xlu0 %80
  %84 = vset.pattern.permute.xlu0 0
  %85 = vperm.xlu0 %84, %v47
  %v86 = vpop.permute.xlu0 %85
  %v88 = vld [vmem:[%s4] sm:$0xff]
  %v89 = vld [vmem:[%s4 + $0x8] sm:$0xff]
  %v90 = vld [vmem:[%s4 + $0x10] sm:$0xff]
  %v91 = vld [vmem:[%s4 + $0x18] sm:$0xff]
  %93 = vset.pattern.permute.xlu0 0
  %94 = vperm.xlu0 %93, %v88
  %v95 = vpop.permute.xlu0 %94
  %98 = vset.pattern.permute.xlu0 0
  %99 = vperm.xlu0 %98, %v89
  %v100 = vpop.permute.xlu0 %99
  %103 = vset.pattern.permute.xlu0 0
  %104 = vperm.xlu0 %103, %v90
  %v105 = vpop.permute.xlu0 %104
  %108 = vset.pattern.permute.xlu0 0
  %109 = vperm.xlu0 %108, %v91
  %v110 = vpop.permute.xlu0 %109
  %s112 = sld [smem:[#allocation2]]
  %v113 = vld [vmem:[%s0] sm:$0xff]
  %115 = vst [vmem:[#allocation1] ss:$2 sm:$0xff] %v113
  %v116 = vld.sshfl [vmem:[#allocation1] sm:$0xff pattern:$0x75316420]
  %v117 = vld.sshfl [vmem:[#allocation1 + $0x8] sm:$0xff pattern:$0x75316420]
  %vm118 = vcmask 31744
  %v120 = vsel %vm118, %v27, 0
  %v123 = vsel %vm118, %v28, 0
  %v126 = vsel %vm118, %v29, 0
  %v129 = vsel %vm118, %v30, 0
  %v132 = vsel %vm118, %v31, 0
  %v135 = vsel %vm118, %v32, 0
  %v138 = vsel %vm118, %v33, 0
  %v141 = vsel %vm118, %v34, 0
  %vm143 = vcmask 1043456
  %v144 = vsel %vm143, %v116, 0
  %v146 = vsel %vm143, %v117, 0
  %148 = vmatpush.msra.mxu0 0.0
  %149 = vmatpush.msra.mxu0 0.0
  %150 = vmatpush.msra.mxu0 0.0
  %151 = vmatpush.msra.mxu0 0.0
  %152 = vmatpush.msra.mxu0 0.0
  %153 = vmatpush.msra.mxu0 0.0
  %154 = vmatpush.msra.mxu0 0.0
  %155 = vmatpush.msra.mxu0 0.0
  %156 = vmatpush.msra.mxu0 0.0
  %157 = vmatpush.msra.mxu0 0.0
  %158 = vmatpush.msra.mxu0 0.0
  %159 = vmatpush.msra.mxu0 0.0
  %160 = vmatpush.msra.mxu0 0.0
  %161 = vmatpush.msra.mxu0 0.0
  %162 = vmatpush.msra.mxu0 0.0
  %163 = vmatpush.msra.mxu0 %v144
  %164 = vmatmul.f32.gmra.mxu0 %v120
  %v165 = vpop.f32.mrf.mxu0
  %v166 = vadd.f32 %v51, %v165
  %167 = vmatmul.f32.gmra.mxu0 %v123
  %v168 = vpop.f32.mrf.mxu0
  %v169 = vadd.f32 %v56, %v168
  %170 = vmatmul.f32.gmra.mxu0 %v126
  %v171 = vpop.f32.mrf.mxu0
  %v172 = vadd.f32 %v61, %v171
  %173 = vmatmul.f32.gmra.mxu0 %v129
  %v174 = vpop.f32.mrf.mxu0
  %v175 = vadd.f32 %v66, %v174
  %176 = vmatmul.f32.gmra.mxu0 %v132
  %v177 = vpop.f32.mrf.mxu0
  %v178 = vadd.f32 %v71, %v177
  %179 = vmatmul.f32.gmra.mxu0 %v135
  %v180 = vpop.f32.mrf.mxu0
  %v181 = vadd.f32 %v76, %v180
  %182 = vmatmul.f32.gmra.mxu0 %v138
  %v183 = vpop.f32.mrf.mxu0
  %v184 = vadd.f32 %v81, %v183
  %185 = vmatmul.f32.gmra.mxu0 %v141
  %v186 = vpop.f32.mrf.mxu0
  %v187 = vadd.f32 %v86, %v186
  %188 = vdwg.mxu0
  %189 = vmatpush.msra.mxu0 0.0
  %190 = vmatpush.msra.mxu0 0.0
  %191 = vmatpush.msra.mxu0 0.0
  %192 = vmatpush.msra.mxu0 0.0
  %193 = vmatpush.msra.mxu0 0.0
  %194 = vmatpush.msra.mxu0 0.0
  %195 = vmatpush.msra.mxu0 0.0
  %196 = vmatpush.msra.mxu0 0.0
  %197 = vmatpush.msra.mxu0 0.0
  %198 = vmatpush.msra.mxu0 0.0
  %199 = vmatpush.msra.mxu0 0.0
  %200 = vmatpush.msra.mxu0 0.0
  %201 = vmatpush.msra.mxu0 0.0
  %202 = vmatpush.msra.mxu0 0.0
  %203 = vmatpush.msra.mxu0 0.0
  %204 = vmatpush.msra.mxu0 %v146
  %205 = vmatmul.f32.gmra.mxu0 %v120
  %v206 = vpop.f32.mrf.mxu0
  %v207 = vadd.f32 %v51, %v206
  %208 = vmatmul.f32.gmra.mxu0 %v123
  %v209 = vpop.f32.mrf.mxu0
  %v210 = vadd.f32 %v56, %v209
  %211 = vmatmul.f32.gmra.mxu0 %v126
  %v212 = vpop.f32.mrf.mxu0
  %v213 = vadd.f32 %v61, %v212
  %214 = vmatmul.f32.gmra.mxu0 %v129
  %v215 = vpop.f32.mrf.mxu0
  %v216 = vadd.f32 %v66, %v215
  %217 = vmatmul.f32.gmra.mxu0 %v132
  %v218 = vpop.f32.mrf.mxu0
  %v219 = vadd.f32 %v71, %v218
  %220 = vmatmul.f32.gmra.mxu0 %v135
  %v221 = vpop.f32.mrf.mxu0
  %v222 = vadd.f32 %v76, %v221
  %223 = vmatmul.f32.gmra.mxu0 %v138
  %v224 = vpop.f32.mrf.mxu0
  %v225 = vadd.f32 %v81, %v224
  %226 = vmatmul.f32.gmra.mxu0 %v141
  %v227 = vpop.f32.mrf.mxu0
  %v228 = vadd.f32 %v86, %v227
  %229 = vdwg.mxu0
  %v230 = vmax.f32 %v166, 0.0
  %v231 = vmax.f32 %v207, 0.0
  %v232 = vmax.f32 %v169, 0.0
  %v233 = vmax.f32 %v210, 0.0
  %v234 = vmax.f32 %v172, 0.0
  %v235 = vmax.f32 %v213, 0.0
  %v236 = vmax.f32 %v175, 0.0
  %v237 = vmax.f32 %v216, 0.0
  %v238 = vmax.f32 %v178, 0.0
  %v239 = vmax.f32 %v219, 0.0
  %v240 = vmax.f32 %v181, 0.0
  %v241 = vmax.f32 %v222, 0.0
  %v242 = vmax.f32 %v184, 0.0
  %v243 = vmax.f32 %v225, 0.0
  %v244 = vmax.f32 %v187, 0.0
  %v245 = vmax.f32 %v228, 0.0
  %vm246 = vcmask 523264
  %v248 = vsel %vm246, %v35, 0
  %v251 = vsel %vm246, %v36, 0
  %v254 = vsel %vm246, %v37, 0
  %v257 = vsel %vm246, %v38, 0
  %259 = vmatpush.msra.mxu0 0.0
  %260 = vmatpush.msra.mxu0 0.0
  %261 = vmatpush.msra.mxu0 0.0
  %262 = vmatpush.msra.mxu0 0.0
  %263 = vmatpush.msra.mxu0 0.0
  %264 = vmatpush.msra.mxu0 0.0
  %265 = vmatpush.msra.mxu0 0.0
  %266 = vmatpush.msra.mxu0 0.0
  %267 = vmatpush.msra.mxu0 %v244
  %268 = vmatpush.msra.mxu0 %v242
  %269 = vmatpush.msra.mxu0 %v240
  %270 = vmatpush.msra.mxu0 %v238
  %271 = vmatpush.msra.mxu0 %v236
  %272 = vmatpush.msra.mxu0 %v234
  %273 = vmatpush.msra.mxu0 %v232
  %274 = vmatpush.msra.mxu0 %v230
  %275 = vmatmul.f32.gmra.mxu0 %v248
  %v276 = vpop.f32.mrf.mxu0
  %v277 = vadd.f32 %v95, %v276
  %278 = vmatmul.f32.gmra.mxu0 %v251
  %v279 = vpop.f32.mrf.mxu0
  %v280 = vadd.f32 %v100, %v279
  %281 = vmatmul.f32.gmra.mxu0 %v254
  %v282 = vpop.f32.mrf.mxu0
  %v283 = vadd.f32 %v105, %v282
  %284 = vmatmul.f32.gmra.mxu0 %v257
  %v285 = vpop.f32.mrf.mxu0
  %v286 = vadd.f32 %v110, %v285
  %287 = vdwg.mxu0
  %288 = vmatpush.msra.mxu0 0.0
  %289 = vmatpush.msra.mxu0 0.0
  %290 = vmatpush.msra.mxu0 0.0
  %291 = vmatpush.msra.mxu0 0.0
  %292 = vmatpush.msra.mxu0 0.0
  %293 = vmatpush.msra.mxu0 0.0
  %294 = vmatpush.msra.mxu0 0.0
  %295 = vmatpush.msra.mxu0 0.0
  %296 = vmatpush.msra.mxu0 %v245
  %297 = vmatpush.msra.mxu0 %v243
  %298 = vmatpush.msra.mxu0 %v241
  %299 = vmatpush.msra.mxu0 %v239
  %300 = vmatpush.msra.mxu0 %v237
  %301 = vmatpush.msra.mxu0 %v235
  %302 = vmatpush.msra.mxu0 %v233
  %303 = vmatpush.msra.mxu0 %v231
  %304 = vmatmul.f32.gmra.mxu0 %v248
  %v305 = vpop.f32.mrf.mxu0
  %v306 = vadd.f32 %v95, %v305
  %307 = vmatmul.f32.gmra.mxu0 %v251
  %v308 = vpop.f32.mrf.mxu0
  %v309 = vadd.f32 %v100, %v308
  %310 = vmatmul.f32.gmra.mxu0 %v254
  %v311 = vpop.f32.mrf.mxu0
  %v312 = vadd.f32 %v105, %v311
  %313 = vmatmul.f32.gmra.mxu0 %v257
  %v314 = vpop.f32.mrf.mxu0
  %v315 = vadd.f32 %v110, %v314
  %316 = vdwg.mxu0
  %v317 = vmax.f32 %v277, 0.0
  %v318 = vmax.f32 %v306, 0.0
  %v319 = vmax.f32 %v280, 0.0
  %v320 = vmax.f32 %v309, 0.0
  %v321 = vmax.f32 %v283, 0.0
  %v322 = vmax.f32 %v312, 0.0
  %v323 = vmax.f32 %v286, 0.0
  %v324 = vmax.f32 %v315, 0.0
  %v325 = vstv %s112
  %vm326 = vcmask 261120
  %v328 = vsel %vm326, %v39, 0
  %330 = vmatpush.msra.mxu0 0.0
  %331 = vmatpush.msra.mxu0 0.0
  %332 = vmatpush.msra.mxu0 0.0
  %333 = vmatpush.msra.mxu0 0.0
  %334 = vmatpush.msra.mxu0 0.0
  %335 = vmatpush.msra.mxu0 0.0
  %336 = vmatpush.msra.mxu0 0.0
  %337 = vmatpush.msra.mxu0 0.0
  %338 = vmatpush.msra.mxu0 0.0
  %339 = vmatpush.msra.mxu0 0.0
  %340 = vmatpush.msra.mxu0 0.0
  %341 = vmatpush.msra.mxu0 0.0
  %342 = vmatpush.msra.mxu0 %v323
  %343 = vmatpush.msra.mxu0 %v321
  %344 = vmatpush.msra.mxu0 %v319
  %345 = vmatpush.msra.mxu0 %v317
  %346 = vmatmul.f32.gmra.mxu0 %v328
  %v347 = vpop.f32.mrf.mxu0
  %v348 = vadd.f32 %v325, %v347
  %349 = vdwg.mxu0
  %350 = vmatpush.msra.mxu0 0.0
  %351 = vmatpush.msra.mxu0 0.0
  %352 = vmatpush.msra.mxu0 0.0
  %353 = vmatpush.msra.mxu0 0.0
  %354 = vmatpush.msra.mxu0 0.0
  %355 = vmatpush.msra.mxu0 0.0
  %356 = vmatpush.msra.mxu0 0.0
  %357 = vmatpush.msra.mxu0 0.0
  %358 = vmatpush.msra.mxu0 0.0
  %359 = vmatpush.msra.mxu0 0.0
  %360 = vmatpush.msra.mxu0 0.0
  %361 = vmatpush.msra.mxu0 0.0
  %362 = vmatpush.msra.mxu0 %v324
  %363 = vmatpush.msra.mxu0 %v322
  %364 = vmatpush.msra.mxu0 %v320
  %365 = vmatpush.msra.mxu0 %v318
  %366 = vmatmul.f32.gmra.mxu0 %v328
  %v367 = vpop.f32.mrf.mxu0
  %v368 = vadd.f32 %v325, %v367
  %369 = vdwg.mxu0
  %v372 = vrot.slane %v368, 7
  %vm373 = vcmask 1040384
  %v374 = vsel %vm373, %v348, %v372
  %v376 = vlaneseq
  %vm377 = vcmp.ge.s32.totalorder %v376, 0
  %vm378 = vcmp.lt.s32.totalorder %v376, 256
  %vm379 = vmand %vm377, %vm378
  %380 = vst.msk [vmem:[%s7] sm:$0x3] %vm379, %v374
  // Predicated region
  $region30: #{_dotacion_impl.1} parent=0 // pred_check
    _
  $region31: #{_dotacion_impl.1} parent=0 // pred_check_branch
    %382 = sbr.rel (0) target = $region33
  $region32: #{_dotacion_impl.1} parent=0 // pred_region
    _
  $region33: #{_dotacion_impl.1} parent=0 // pred_fallthru
    _
  // Predicated region
  $region34: #{_dotacion_impl.1} parent=0 // pred_check
    _
  $region35: #{_dotacion_impl.1} parent=0 // pred_check_branch
    %384 = sbr.rel (0) target = $region37
  $region36: #{_dotacion_impl.1} parent=0 // pred_region
    _
  $region37: #{_dotacion_impl.1} parent=0 // pred_fallthru
    _

</llo_original>
